<compile_context>
chip_gen: v7x
topology: tpu7x:2x2x1
jax: 0.10.0
libtpu: 0.0.40
codegen_flags: <defaults>
</compile_context>

<pallas_src>
import functools

import jax
import jax.numpy as jnp
from jax.experimental import pallas as pl
from jax.experimental.pallas import tpu as pltpu


def _cdiv(a, b):
    return -(-a // b)


def _round_down8(x):
    return max(8, (x // 8) * 8)


def _tpu_budgets():
    """(per-buffer row-tile bytes, scoped-VMEM limit) per TPU generation."""
    try:
        vmem = pltpu.get_tpu_info().vmem_capacity_bytes
    except Exception:                                   # no info -> conservative
        vmem = None
    if vmem is not None and vmem >= 100 * 1024 * 1024:  # v5e / v6e: 128 MiB VMEM
        return 8 * 1024 * 1024, 64 * 1024 * 1024
    # v7x (64 MiB per TensorCore) or unknown: stay conservative.
    return 4 * 1024 * 1024, 40 * 1024 * 1024


# --------------------------------------------------------------------------- #
# Kernels
# --------------------------------------------------------------------------- #
def _bn_fused_kernel(gamma_ref, beta_ref, pivot_ref, x_ref, o_ref,
                     *, eps, inv_n, k, c):
    """Single pass: stats + normalize on a VMEM-resident (rows, cp) block."""
    p = pivot_ref[...]                                   # (1, cp) per-channel pivot
    x = x_ref[...].astype(jnp.float32)                   # (rows, cp)
    xs = x - p                                           # shifted for stable var
    s = jnp.sum(xs, axis=0, keepdims=True)               # (1, cp)
    q = jnp.sum(xs * xs, axis=0, keepdims=True)
    if k > 1:
        # Packed layout: lane j*c + cc holds the partial for channel cc of row
        # subgroup j; summing all k lane rotations by multiples of c leaves every
        # lane with its channel total.
        s_t, q_t = s, q
        for j in range(1, k):
            s_t = s_t + pltpu.roll(s, shift=j * c, axis=1)
            q_t = q_t + pltpu.roll(q, shift=j * c, axis=1)
        s, q = s_t, q_t
    ms = s * inv_n                                       # E[x - p]
    var = jnp.maximum(q * inv_n - ms * ms, 0.0)          # biased var (training mode)
    inv_std = jax.lax.rsqrt(var + eps)
    scale = gamma_ref[...] * inv_std
    bias = beta_ref[...] - (p + ms) * scale
    o_ref[...] = (x * scale + bias).astype(o_ref.dtype)


def _bn_stats_kernel(pivot_ref, x_ref, sum_out_ref, ssq_out_ref,
                     sum8_ref, ssq8_ref, *, tiles_per_split, rows_total, tm):
    """Pass 1: per-split shifted sum / sumsq over row tiles (VALU accumulation)."""
    j = pl.program_id(1)                                 # tile within split

    @pl.when(j == 0)
    def _init():
        sum8_ref[...] = jnp.zeros_like(sum8_ref)
        ssq8_ref[...] = jnp.zeros_like(ssq8_ref)

    t = pl.program_id(0) * tiles_per_split + j           # unclamped global tile idx
    x = x_ref[...].astype(jnp.float32) - pivot_ref[...]  # (tm, cp), shifted
    # Mask rows past the end of the array: covers both the ragged last tile and
    # overhang tiles whose index_map was clamped (n_tiles % n_splits != 0).
    row = jax.lax.broadcasted_iota(jnp.int32, x.shape, 0)
    x = jnp.where(t * tm + row < rows_total, x, 0.0)
    x3 = x.reshape(tm // 8, 8, x.shape[1])
    # Bulk accumulation = element-wise vreg adds; the cross-sublane reduce is
    # deferred to the apply pass (tiny, once per output tile).
    sum8_ref[...] += jnp.sum(x3, axis=0)
    ssq8_ref[...] += jnp.sum(x3 * x3, axis=0)

    @pl.when(j == tiles_per_split - 1)
    def _emit():
        sum_out_ref[...] = sum8_ref[...]
        ssq_out_ref[...] = ssq8_ref[...]


def _bn_apply_kernel(gamma_ref, beta_ref, pivot_ref, sums_ref, ssqs_ref,
                     x_ref, o_ref, *, eps, inv_n, k, c):
    """Pass 2: fold the per-split partials (cheap, XLU/EUP slack) and normalize."""
    s = jnp.sum(sums_ref[...], axis=0, keepdims=True)    # (1, cp)
    q = jnp.sum(ssqs_ref[...], axis=0, keepdims=True)
    if k > 1:
        s_t, q_t = s, q
        for j in range(1, k):
            s_t = s_t + pltpu.roll(s, shift=j * c, axis=1)
            q_t = q_t + pltpu.roll(q, shift=j * c, axis=1)
        s, q = s_t, q_t
    ms = s * inv_n
    var = jnp.maximum(q * inv_n - ms * ms, 0.0)
    inv_std = jax.lax.rsqrt(var + eps)
    scale = gamma_ref[...] * inv_std
    bias = beta_ref[...] - (pivot_ref[...] + ms) * scale

    x = x_ref[...]
    if x.dtype == jnp.float32:
        o_ref[...] = x * scale + bias
    else:
        # bf16 path: keep the streamed tile in bf16 (halves VMEM/vreg pressure;
        # v6e/v7x have bf16 VALU).  TODO(synk): keep f32 math on v5e if needed.
        o_ref[...] = (x * scale.astype(x.dtype)
                      + bias.astype(x.dtype)).astype(o_ref.dtype)


# --------------------------------------------------------------------------- #
# Wrapper
# --------------------------------------------------------------------------- #
def batchnorm1d_pallas(x_nlc, gamma, beta, eps=1e-5, *,
                       force_two_pass=False, tile_rows=None):
    """Training-mode BatchNorm1d over channels C of x_nlc (N, L, C); stats over N*L."""
    N, L, C = x_nlc.shape
    R = N * L
    x2 = x_nlc.reshape(R, C)

    # ---- lane-dense channel layout (no padding, ever) --------------------------
    if C % 128 == 0:
        k, cp = 1, C
    elif 128 % C == 0 and R % (128 // C) == 0:
        k, cp = 128 // C, 128            # pack k consecutive rows per vreg row
    else:
        k, cp = 1, C                      # <128 lanes: masked partial-lane stores

    rp = R // k
    xp = x2.reshape(rp, cp) if k > 1 else x2          # pure reshape, no copy

    gf = gamma.astype(jnp.float32).reshape(1, C)
    bf = beta.astype(jnp.float32).reshape(1, C)
    pv = x2[0:1].astype(jnp.float32)                  # per-channel pivot (shifted sums)
    if k > 1:
        gf = jnp.tile(gf, (1, k))
        bf = jnp.tile(bf, (1, k))
        pv = jnp.tile(pv, (1, k))

    tile_bytes, vmem_limit = _tpu_budgets()
    inv_n = 1.0 / R
    x_f32_bytes = rp * cp * 4

    # ---- fused single-pass path: whole packed x resident in VMEM ---------------
    use_fused = (x_f32_bytes <= vmem_limit // 10 and not force_two_pass) or rp < 8
    if use_fused:
        y = pl.pallas_call(
            functools.partial(_bn_fused_kernel, eps=eps, inv_n=inv_n, k=k, c=C),
            out_shape=jax.ShapeDtypeStruct((rp, cp), x_nlc.dtype),
            grid_spec=pltpu.PrefetchScalarGridSpec(
                num_scalar_prefetch=0,
                grid=(1,),
                in_specs=[pl.BlockSpec((1, cp), lambda i: (0, 0)),
                          pl.BlockSpec((1, cp), lambda i: (0, 0)),
                          pl.BlockSpec((1, cp), lambda i: (0, 0)),
                          pl.BlockSpec((rp, cp), lambda i: (0, 0))],
                out_specs=pl.BlockSpec((rp, cp), lambda i: (0, 0))),
            compiler_params=pltpu.CompilerParams(
                dimension_semantics=("arbitrary",),
                vmem_limit_bytes=vmem_limit),
        )(gf, bf, pv, xp)
    else:
        # ---- two-pass streaming path --------------------------------------------
        if tile_rows is not None:
            tm = _round_down8(int(tile_rows))
        else:
            tm = _round_down8(tile_bytes // (cp * 4))     # no artificial row cap
        tm = min(tm, _round_down8(rp))
        n_tiles = _cdiv(rp, tm)
        n_splits = 2 if n_tiles >= 2 else 1               # both TCs on v7x megacore
        tps = _cdiv(n_tiles, n_splits)

        # Phase 1: per-split partial (8, cp) sum / sumsq accumulators.
        sums, ssqs = pl.pallas_call(
            functools.partial(_bn_stats_kernel, tiles_per_split=tps,
                              rows_total=rp, tm=tm),
            out_shape=(jax.ShapeDtypeStruct((n_splits * 8, cp), jnp.float32),
                       jax.ShapeDtypeStruct((n_splits * 8, cp), jnp.float32)),
            grid_spec=pltpu.PrefetchScalarGridSpec(
                num_scalar_prefetch=0,
                grid=(n_splits, tps),
                in_specs=[pl.BlockSpec((1, cp), lambda s, j: (0, 0)),
                          pl.BlockSpec(
                              (tm, cp),
                              lambda s, j: (jnp.minimum(s * tps + j, n_tiles - 1), 0))],
                out_specs=[pl.BlockSpec((8, cp), lambda s, j: (s, 0)),
                           pl.BlockSpec((8, cp), lambda s, j: (s, 0))],
                scratch_shapes=[pltpu.VMEM((8, cp), jnp.float32),
                                pltpu.VMEM((8, cp), jnp.float32)]),
            compiler_params=pltpu.CompilerParams(
                dimension_semantics=("parallel", "arbitrary"),
                vmem_limit_bytes=vmem_limit),
        )(pv, xp)

        # Phase 2: fold partials in-kernel (per tile, cheap) and normalize.
        y = pl.pallas_call(
            functools.partial(_bn_apply_kernel, eps=eps, inv_n=inv_n, k=k, c=C),
            out_shape=jax.ShapeDtypeStruct((rp, cp), x_nlc.dtype),
            grid_spec=pltpu.PrefetchScalarGridSpec(
                num_scalar_prefetch=0,
                grid=(n_tiles,),
                in_specs=[pl.BlockSpec((1, cp), lambda i: (0, 0)),
                          pl.BlockSpec((1, cp), lambda i: (0, 0)),
                          pl.BlockSpec((1, cp), lambda i: (0, 0)),
                          pl.BlockSpec((n_splits * 8, cp), lambda i: (0, 0)),
                          pl.BlockSpec((n_splits * 8, cp), lambda i: (0, 0)),
                          pl.BlockSpec((tm, cp), lambda i: (i, 0))],
                out_specs=pl.BlockSpec((tm, cp), lambda i: (i, 0))),
            compiler_params=pltpu.CompilerParams(
                dimension_semantics=("parallel",),
                vmem_limit_bytes=vmem_limit),
        )(gf, bf, pv, sums, ssqs, xp)

    # ---- unpack back to (N, L, C): pure reshapes, no copies ---------------------
    y2 = y.reshape(R, C) if k > 1 else y
    return y2.reshape(N, L, C)


def batchnorm_module_forward(x, gamma, beta, eps=1e-5):
    """Exact forward of the reference `BatchNorm` module.

    The reference module returns transpose(x, 1, 2); its BatchNorm output is dead
    code.  We return that exact value (first), plus the Pallas BN hot-path result
    (second) for inspection.
    """
    # TODO(synk): nn.BatchNorm1d running_mean/running_var momentum buffer updates
    # (training-time state) are not emitted.
    bn_out_nlc = batchnorm1d_pallas(x, gamma, beta, eps)
    # TODO(synk): fuse this transpose into the Pallas apply pass (second, (C, L)-
    # blocked output written from the tile already in VMEM) to save one HBM read
    # of x when both outputs are consumed; skip the BN call entirely when only
    # the module's literal output is needed.
    module_out = jnp.transpose(x, (0, 2, 1))
    return module_out, bn_out_nlc


# --------------------------------------------------------------------------- #
# Self-test
# --------------------------------------------------------------------------- #
def _ref_bn(x, g, b, eps=1e-5):
    N, L, C = x.shape
    xf = x.reshape(N * L, C).astype(jnp.float32)
    mean = xf.mean(axis=0, keepdims=True)
    var = ((xf - mean) ** 2).mean(axis=0, keepdims=True)
    y = (xf - mean) / jnp.sqrt(var + eps) * g.astype(jnp.float32) + b.astype(jnp.float32)
    return y.reshape(N, L, C).astype(x.dtype)


if __name__ == "__main__":
    key = jax.random.PRNGKey(0)
    k1, k2, k3, k4 = jax.random.split(key, 4)

    # ---- 1) module-consistent small shape: batch=2, seq=8, hidden=32 (fused,
    #         packed k=4 lanes).  nn.BatchNorm1d default affine: weight=1, bias=0.
    N, L, C = 2, 8, 32
    x = jax.random.normal(k1, (N, L, C), dtype=jnp.float32)
    gamma = jnp.ones((C,), dtype=jnp.float32)
    beta = jnp.zeros((C,), dtype=jnp.float32)

    module_out, bn_out = batchnorm_module_forward(x, gamma, beta)
    module_out = jax.block_until_ready(module_out)
    bn_out = jax.block_until_ready(bn_out)
    assert module_out.shape == (N, C, L)
    assert jnp.allclose(module_out, jnp.transpose(x, (0, 2, 1)))
    assert jnp.allclose(bn_out, _ref_bn(x, gamma, beta), atol=1e-4, rtol=1e-4)

    # ---- 2) fused path, C not a divisor/multiple of 128 (partial-lane blocks,
    #         no channel padding), non-trivial affine.
    N2, L2, C2 = 2, 64, 48
    x2 = jax.random.normal(k2, (N2, L2, C2), dtype=jnp.float32)
    g2 = 1.0 + 0.1 * jnp.arange(C2, dtype=jnp.float32)
    b2 = 0.05 * jnp.arange(C2, dtype=jnp.float32)
    bn2 = jax.block_until_ready(batchnorm1d_pallas(x2, g2, b2))
    assert jnp.allclose(bn2, _ref_bn(x2, g2, b2), atol=1e-3, rtol=1e-3)

    # ---- 3) forced two-pass path with ragged last tile AND an odd tile count
    #         (exercises in-kernel row masking, index-map clamping, the split
    #         stats grid, and partial-block output stores).
    N3, L3, C3 = 4, 2048, 128
    x3 = jax.random.normal(k3, (N3, L3, C3), dtype=jnp.float32)
    g3 = 1.0 + 0.05 * jnp.arange(C3, dtype=jnp.float32)
    b3 = 0.02 * jnp.arange(C3, dtype=jnp.float32)
    bn3 = jax.block_until_ready(
        batchnorm1d_pallas(x3, g3, b3, force_two_pass=True, tile_rows=768))
    assert jnp.allclose(bn3, _ref_bn(x3, g3, b3), atol=1e-3, rtol=1e-3)

    # ---- 4) auto-dispatched two-pass path (x too large for the fused path on
    #         every generation), budget-sized tiles.
    N4, L4, C4 = 4, 8192, 128
    x4 = jax.random.normal(k4, (N4, L4, C4), dtype=jnp.float32)
    g4 = 1.0 + 0.01 * jnp.arange(C4, dtype=jnp.float32)
    b4 = -0.01 * jnp.arange(C4, dtype=jnp.float32)
    bn4 = jax.block_until_ready(batchnorm1d_pallas(x4, g4, b4))
    assert jnp.allclose(bn4, _ref_bn(x4, g4, b4), atol=1e-3, rtol=1e-3)

    print("KERNEL_OK")
</pallas_src>

<mosaic_0001>
module attributes {stable_mosaic.version = 11 : i64} {
  func.func @_bn_fused_kernel(%arg0: i32, %arg1: memref<1x128xf32, #tpu.memory_space<vmem>>, %arg2: memref<1x128xf32, #tpu.memory_space<vmem>>, %arg3: memref<1x128xf32, #tpu.memory_space<vmem>>, %arg4: memref<4x128xf32, #tpu.memory_space<vmem>>, %arg5: memref<4x128xf32, #tpu.memory_space<vmem>>) attributes {dimension_semantics = [#tpu.dimension_semantics<arbitrary>], iteration_bounds = array<i64: 1>, scalar_prefetch = 0 : i64, scratch_operands = 0 : i64, tpu.core_type = #tpu.core_type<tc>, window_params = [{pipeline_mode = #tpu.pipeline_mode<synchronous>, transform_indices = @transform_0, window_bounds = array<i64: 1, 128>}, {pipeline_mode = #tpu.pipeline_mode<synchronous>, transform_indices = @transform_1, window_bounds = array<i64: 1, 128>}, {pipeline_mode = #tpu.pipeline_mode<synchronous>, transform_indices = @transform_2, window_bounds = array<i64: 1, 128>}, {pipeline_mode = #tpu.pipeline_mode<synchronous>, transform_indices = @transform_3, window_bounds = array<i64: 4, 128>}, {pipeline_mode = #tpu.pipeline_mode<synchronous>, transform_indices = @transform_4, window_bounds = array<i64: 4, 128>}]} {
    %c0 = arith.constant 0 : index
    %c0_0 = arith.constant 0 : index
    %0 = vector.load %arg3[%c0, %c0_0] : memref<1x128xf32, #tpu.memory_space<vmem>>, vector<1x128xf32>
    %c0_1 = arith.constant 0 : index
    %c0_2 = arith.constant 0 : index
    %1 = vector.load %arg4[%c0_1, %c0_2] : memref<4x128xf32, #tpu.memory_space<vmem>>, vector<4x128xf32>
    %2 = vector.broadcast %0 : vector<1x128xf32> to vector<4x128xf32>
    %3 = arith.subf %1, %2 : vector<4x128xf32>
    %cst = arith.constant dense<0.000000e+00> : vector<128xf32>
    %4 = vector.multi_reduction <add>, %3, %cst [0] : vector<4x128xf32> to vector<128xf32>
    %5 = vector.shape_cast %4 : vector<128xf32> to vector<1x128xf32>
    %6 = arith.mulf %3, %3 : vector<4x128xf32>
    %cst_3 = arith.constant dense<0.000000e+00> : vector<128xf32>
    %7 = vector.multi_reduction <add>, %6, %cst_3 [0] : vector<4x128xf32> to vector<128xf32>
    %8 = vector.shape_cast %7 : vector<128xf32> to vector<1x128xf32>
    %c32_i32 = arith.constant 32 : i32
    %9 = tpu.dynamic_rotate %5 by %c32_i32 dim 1 : vector<1x128xf32>, i32 -> vector<1x128xf32>
    %10 = arith.addf %5, %9 : vector<1x128xf32>
    %c32_i32_4 = arith.constant 32 : i32
    %11 = tpu.dynamic_rotate %8 by %c32_i32_4 dim 1 : vector<1x128xf32>, i32 -> vector<1x128xf32>
    %12 = arith.addf %8, %11 : vector<1x128xf32>
    %c64_i32 = arith.constant 64 : i32
    %13 = tpu.dynamic_rotate %5 by %c64_i32 dim 1 : vector<1x128xf32>, i32 -> vector<1x128xf32>
    %14 = arith.addf %10, %13 : vector<1x128xf32>
    %c64_i32_5 = arith.constant 64 : i32
    %15 = tpu.dynamic_rotate %8 by %c64_i32_5 dim 1 : vector<1x128xf32>, i32 -> vector<1x128xf32>
    %16 = arith.addf %12, %15 : vector<1x128xf32>
    %c96_i32 = arith.constant 96 : i32
    %17 = tpu.dynamic_rotate %5 by %c96_i32 dim 1 : vector<1x128xf32>, i32 -> vector<1x128xf32>
    %18 = arith.addf %14, %17 : vector<1x128xf32>
    %c96_i32_6 = arith.constant 96 : i32
    %19 = tpu.dynamic_rotate %8 by %c96_i32_6 dim 1 : vector<1x128xf32>, i32 -> vector<1x128xf32>
    %20 = arith.addf %16, %19 : vector<1x128xf32>
    %cst_7 = arith.constant 6.250000e-02 : f32
    %21 = vector.broadcast %cst_7 : f32 to vector<1x128xf32>
    %22 = arith.mulf %18, %21 : vector<1x128xf32>
    %cst_8 = arith.constant 6.250000e-02 : f32
    %23 = vector.broadcast %cst_8 : f32 to vector<1x128xf32>
    %24 = arith.mulf %20, %23 : vector<1x128xf32>
    %25 = arith.mulf %22, %22 : vector<1x128xf32>
    %26 = arith.subf %24, %25 : vector<1x128xf32>
    %cst_9 = arith.constant 0.000000e+00 : f32
    %27 = vector.broadcast %cst_9 : f32 to vector<1x128xf32>
    %28 = arith.maximumf %26, %27 : vector<1x128xf32>
    %cst_10 = arith.constant 9.99999974E-6 : f32
    %29 = vector.broadcast %cst_10 : f32 to vector<1x128xf32>
    %30 = arith.addf %28, %29 : vector<1x128xf32>
    %31 = math.rsqrt %30 : vector<1x128xf32>
    %c0_11 = arith.constant 0 : index
    %c0_12 = arith.constant 0 : index
    %32 = vector.load %arg1[%c0_11, %c0_12] : memref<1x128xf32, #tpu.memory_space<vmem>>, vector<1x128xf32>
    %33 = arith.mulf %32, %31 : vector<1x128xf32>
    %c0_13 = arith.constant 0 : index
    %c0_14 = arith.constant 0 : index
    %34 = vector.load %arg2[%c0_13, %c0_14] : memref<1x128xf32, #tpu.memory_space<vmem>>, vector<1x128xf32>
    %35 = arith.addf %0, %22 : vector<1x128xf32>
    %36 = arith.mulf %35, %33 : vector<1x128xf32>
    %37 = arith.subf %34, %36 : vector<1x128xf32>
    %38 = vector.broadcast %33 : vector<1x128xf32> to vector<4x128xf32>
    %39 = arith.mulf %1, %38 : vector<4x128xf32>
    %40 = vector.broadcast %37 : vector<1x128xf32> to vector<4x128xf32>
    %41 = arith.addf %39, %40 : vector<4x128xf32>
    %c0_15 = arith.constant 0 : index
    %c0_16 = arith.constant 0 : index
    %42 = vector.load %arg5[%c0_15, %c0_16] : memref<4x128xf32, #tpu.memory_space<vmem>>, vector<4x128xf32>
    tpu.vector_store %arg5[%c0_15, %c0_16], %41 {strides = array<i32>} : memref<4x128xf32, #tpu.memory_space<vmem>>, vector<4x128xf32>,
    return
  }
  func.func @transform_0(%arg0: i32) -> (i32, i32) {
    %c0_i32 = arith.constant 0 : i32
    %c0_i32_0 = arith.constant 0 : i32
    %c0_i32_1 = arith.constant 0 : i32
    return %c0_i32, %c0_i32_0 : i32, i32
  }
  func.func @transform_1(%arg0: i32) -> (i32, i32) {
    %c0_i32 = arith.constant 0 : i32
    %c0_i32_0 = arith.constant 0 : i32
    %c0_i32_1 = arith.constant 0 : i32
    return %c0_i32, %c0_i32_0 : i32, i32
  }
  func.func @transform_2(%arg0: i32) -> (i32, i32) {
    %c0_i32 = arith.constant 0 : i32
    %c0_i32_0 = arith.constant 0 : i32
    %c0_i32_1 = arith.constant 0 : i32
    return %c0_i32, %c0_i32_0 : i32, i32
  }
  func.func @transform_3(%arg0: i32) -> (i32, i32) {
    %c0_i32 = arith.constant 0 : i32
    %c0_i32_0 = arith.constant 0 : i32
    %c0_i32_1 = arith.constant 0 : i32
    return %c0_i32, %c0_i32_0 : i32, i32
  }
  func.func @transform_4(%arg0: i32) -> (i32, i32) {
    %c0_i32 = arith.constant 0 : i32
    %c0_i32_0 = arith.constant 0 : i32
    %c0_i32_1 = arith.constant 0 : i32
    return %c0_i32, %c0_i32_0 : i32, i32
  }
}

</mosaic_0001>

<llo_original>
// kernel: tpu_custom_call.1
$region0: #{tpu_custom_call.1}
  #allocation0 [shape = 'u32[]', space=smem, size = 0x4, offset = 0x4, fixed_abs, tag = 'smem constant byte address 0x4 - core index']
  #allocation1 [shape = 'u32[144,128]{1,0:T(1,128)}', space=vmem, size = 0x12000, scoped, tag = 'internal scratch']
  %s0 = inlined_call_operand.hbm [shape: f32[1,128], index: 0, kind: input, shape index: {}]
  %s1 = inlined_call_operand.vmem [shape: f32[1,128], index: 1, kind: input, shape index: {}]
  %s2 = inlined_call_operand.vmem [shape: f32[1,128], index: 2, kind: input, shape index: {}]
  %s3 = inlined_call_operand.vmem [shape: f32[4,128], index: 3, kind: input, shape index: {}]
  %s4 = inlined_call_operand.hbm [shape: f32[4,128], index: 4, kind: output, shape index: {}]
  %s5 = sld [smem:[#allocation0]]
  $region30: #{tpu_custom_call.1} parent=0
    _
  %s7 = ssub.s32 1, %s5
  %s8 = scalar_select 0, %s7, %s5
  $region1: #{tpu_custom_call.1} parent=0
    #allocation2 [shape = 'u8[512]{0}', space=vmem, size = 0x400, scoped, tag = 'input window, operand 0, single buffered']
    #allocation3 [shape = 's32[1]{0}', space=sflag, size = 0x4, scoped, tag = 'scoped memory for tpu_custom_call.1']
    #allocation4 [shape = 's32[1]{0}', space=sflag, size = 0x4, scoped, tag = 'scoped memory for tpu_custom_call.1']
    #allocation5 [shape = 'u8[2048]{0}', space=vmem, size = 0x800, scoped, tag = 'output window, operand 0, single buffered']
    %9 = vsyncpa [#allocation3], 0
    %10 = vsyncpa [#allocation4], 0
    // Predicated region
    $region2: #{tpu_custom_call.1} parent=1 // pred_check
      _
    $region3: #{tpu_custom_call.1} parent=1 // pred_check_branch
      %12 = sbr.rel (0) target = $region5
    $region4: #{tpu_custom_call.1} parent=1 // pred_region
      %s14 = ssub.s32 16, 16
      %15 = vsyncadd [#allocation3], %s14
      %s17 = sshll.u32 [#allocation2], 4
      %s18 = int_to_ptr.vmem [resolvable:$true] %s17
      %20 = dma.hbm_to_vmem [thread:$0]  %s0, 16, %s18, [#allocation3]
    $region5: #{tpu_custom_call.1} parent=1 // pred_fallthru
      _
    // Predicated region
    $region6: #{tpu_custom_call.1} parent=1 // pred_check
      _
    $region7: #{tpu_custom_call.1} parent=1 // pred_check_branch
      %22 = sbr.rel (0) target = $region9
    $region8: #{tpu_custom_call.1} parent=1 // pred_region
      _
    $region9: #{tpu_custom_call.1} parent=1 // pred_fallthru
      _
    // Predicated region
    $region10: #{tpu_custom_call.1} parent=1 // pred_check
      _
    $region11: #{tpu_custom_call.1} parent=1 // pred_check_branch
      %24 = sbr.rel (0) target = $region13
    $region12: #{tpu_custom_call.1} parent=1 // pred_region
      _
    $region13: #{tpu_custom_call.1} parent=1 // pred_fallthru
      _
    // Predicated region
    $region14: #{tpu_custom_call.1} parent=1 // pred_check
      _
    $region15: #{tpu_custom_call.1} parent=1 // pred_check_branch
      %26 = sbr.rel (0) target = $region17
    $region16: #{tpu_custom_call.1} parent=1 // pred_region
      _
    $region17: #{tpu_custom_call.1} parent=1 // pred_fallthru
      _
    // Predicated region
    $region18: #{tpu_custom_call.1} parent=1 // pred_check
      _
    $region19: #{tpu_custom_call.1} parent=1 // pred_check_branch
      %28 = sbr.rel (0) target = $region21
    $region20: #{tpu_custom_call.1} parent=1 // pred_region
      %29 = dma.done [#allocation3], 16
    $region21: #{tpu_custom_call.1} parent=1 // pred_fallthru
      _
    %v30 = vld [vmem:[%s2] sm:$0x1]
    %v31 = vld [vmem:[%s3] sm:$0xf]
    %v33 = vlaneseq
    %v34 = vshrl.u32 %v33, 7
    %v35 = vsub.s32 0, %v34
    %v36 = vrot.slane %v30, %v35
    %v38 = vsub.f32 %v31, %v36
    %vm39 = vcmask 1043456
    %v40 = vsel %vm39, %v38, 0.0
    %v41 = vrot.slane %v40, 4
    %v42 = vadd.f32 %v40, %v41
    %v43 = vrot.slane %v42, 2
    %v44 = vadd.f32 %v42, %v43
    %v45 = vrot.slane %v44, 1
    %v46 = vadd.f32 %v44, %v45
    %v47 = vmul.f32 %v38, %v38
    %v48 = vsel %vm39, %v47, 0.0
    %v49 = vrot.slane %v48, 4
    %v50 = vadd.f32 %v48, %v49
    %v51 = vrot.slane %v50, 2
    %v52 = vadd.f32 %v50, %v51
    %v53 = vrot.slane %v52, 1
    %v54 = vadd.f32 %v52, %v53
    %55 = vrot.lane.b32.xlu0 %v46, 32
    %v56 = vpop.permute.xlu0 %55
    %v57 = vadd.f32 %v46, %v56
    %58 = vrot.lane.b32.xlu0 %v54, 32
    %v59 = vpop.permute.xlu0 %58
    %v60 = vadd.f32 %v54, %v59
    %61 = vrot.lane.b32.xlu0 %v46, 64
    %v62 = vpop.permute.xlu0 %61
    %v63 = vadd.f32 %v57, %v62
    %64 = vrot.lane.b32.xlu0 %v54, 64
    %v65 = vpop.permute.xlu0 %64
    %v66 = vadd.f32 %v60, %v65
    %67 = vrot.lane.b32.xlu0 %v46, 96
    %v68 = vpop.permute.xlu0 %67
    %v69 = vadd.f32 %v63, %v68
    %70 = vrot.lane.b32.xlu0 %v54, 96
    %v71 = vpop.permute.xlu0 %70
    %v72 = vadd.f32 %v66, %v71
    %v73 = vmul.f32 %v69, 0.0625
    %v74 = vmul.f32 %v72, 0.0625
    %v75 = vmul.f32 %v73, %v73
    %v76 = vsub.f32 %v74, %v75
    %v77 = vmax.f32 %v76, 0.0
    %v78 = vadd.f32 %v77, 1e-05
    %v79 = vrsqrt.pop %v78
    %v80 = vld [vmem:[#allocation2] sm:$0x1]
    %v81 = vmul.f32 %v80, %v79
    %v82 = vld [vmem:[%s1] sm:$0x1]
    %v83 = vadd.f32 %v30, %v73
    %v84 = vmul.f32 %v83, %v81
    %v85 = vsub.f32 %v82, %v84
    %v87 = vlaneseq
    %v88 = vshrl.u32 %v87, 7
    %v89 = vsub.s32 0, %v88
    %v90 = vrot.slane %v81, %v89
    %v92 = vmul.f32 %v31, %v90
    %v94 = vlaneseq
    %v95 = vshrl.u32 %v94, 7
    %v96 = vsub.s32 0, %v95
    %v97 = vrot.slane %v85, %v96
    %v99 = vadd.f32 %v92, %v97
    %100 = vst [vmem:[#allocation5] sm:$0xf] %v99
    // Predicated region
    $region22: #{tpu_custom_call.1} parent=1 // pred_check
      _
    $region23: #{tpu_custom_call.1} parent=1 // pred_check_branch
      %102 = sbr.rel (0) target = $region25
    $region24: #{tpu_custom_call.1} parent=1 // pred_region
      %s104 = ssub.s32 64, 64
      %105 = vsyncadd [#allocation4], %s104
      %s107 = sshll.u32 [#allocation5], 4
      %s108 = int_to_ptr.vmem [resolvable:$true] %s107
      %110 = dma.vmem_to_hbm [thread:$0]  %s108, 64, %s4, [#allocation4]
    $region25: #{tpu_custom_call.1} parent=1 // pred_fallthru
      _
    // Predicated region
    $region26: #{tpu_custom_call.1} parent=1 // pred_check
      _
    $region27: #{tpu_custom_call.1} parent=1 // pred_check_branch
      %112 = sbr.rel (0) target = $region29
    $region28: #{tpu_custom_call.1} parent=1 // pred_region
      %113 = dma.done [#allocation4], 64
    $region29: #{tpu_custom_call.1} parent=1 // pred_fallthru
      _
    %114 = vsyncpa [#allocation3], 1
    %115 = vsyncpa [#allocation4], 1

</llo_original>
